<compile_context>
chip_gen: v7x
topology: tpu7x:2x2x1
jax: 0.10.0
libtpu: 0.0.40
codegen_flags: <defaults>
</compile_context>

<pallas_src>
import math

import jax
import jax.numpy as jnp
from jax.experimental import pallas as pl
from jax.experimental.pallas import tpu as pltpu


def _add_pos_kernel(x_ref, pos_ref, o_ref):
    # x_ref / o_ref: (bB, tT, D_eff) block.  pos_ref: (tT, D_eff) block.
    # Dtypes already match (table pre-cast outside); pos broadcasts over bB.
    o_ref[...] = x_ref[...] + pos_ref[...]


def _sublane_multiple(dtype):
    # Second-minor block dim must be a multiple of the sublane packing factor
    # (or equal the full array extent).
    return {4: 8, 2: 16, 1: 32}.get(jnp.dtype(dtype).itemsize, 8)


def _vmem_config():
    """(vmem_limit_bytes, resident-tile budget) tuned per TPU generation."""
    try:
        vmem_cap = pltpu.get_tpu_info().vmem_capacity_bytes
    except Exception:  # unknown / interpret mode: assume the smallest (v7x per-TC)
        vmem_cap = 64 << 20
    if vmem_cap >= (96 << 20):       # v5e / v6e: 128 MiB physical VMEM
        return 64 << 20, 44 << 20
    return 32 << 20, 22 << 20        # v7x: 64 MiB physical per TensorCore


def _pallas_add_pos(x, pos_table):
    B, T, D = x.shape
    dt = x.dtype
    itemsize = jnp.dtype(dt).itemsize

    # One-time dtype harmonisation: avoids a per-tile cast and halves the pos
    # HBM/VMEM footprint when the table is wider than the activations.
    pos = pos_table if pos_table.dtype == dt else pos_table[:T].astype(dt)
    pos_rows = pos.shape[0]

    # --- Lane-densify small feature dims ------------------------------------
    s = 1
    if D % 128 != 0:
        s_cand = math.lcm(D, 128) // D
        if T % s_cand == 0:
            s = s_cand
    T_eff, D_eff = T // s, D * s

    x_eff = x.reshape(B, T_eff, D_eff)
    if s == 1:
        pos_eff = pos
    elif pos_rows % s == 0:
        pos_eff = pos.reshape(pos_rows // s, D_eff)     # free row-major reshape
    else:
        pos_eff = pos[: T_eff * s].reshape(T_eff, D_eff)

    sub = _sublane_multiple(dt)
    row_bytes = D_eff * itemsize
    vmem_limit, budget = _vmem_config()

    # --- Batch blocking -------------------------------------------------------
    # Largest divisor of B (<= 8) whose minimum-size working set fits the budget.
    # Resident buffers: double-buffered x and out (bB*tT rows each) + pos (tT rows).
    bB = 1
    for cand in range(min(B, 8), 0, -1):
        if B % cand == 0 and (4 * cand + 2) * sub * row_bytes <= budget:
            bB = cand
            break

    # --- T tile: as large as the budget allows (no artificial row cap) --------
    row_budget = max(sub, budget // ((4 * bB + 2) * row_bytes))
    if T_eff <= sub:
        tT = T_eff                                      # full extent (allowed)
    else:
        tT = max(sub, (min(row_budget, T_eff) // sub) * sub)
    num_t = pl.cdiv(T_eff, tT)
    num_b = B // bB

    # v7x megacore: never leave a 1x1 grid when the T extent can be split.
    if num_t == 1 and num_b == 1 and T_eff % sub == 0 and T_eff >= 2 * sub:
        tT = max(sub, (T_eff // 2 // sub) * sub)
        num_t = pl.cdiv(T_eff, tT)

    # A full-extent (non-sublane-multiple) T block requires the pos block to
    # equal the pos array's full extent as well.
    if tT % sub != 0 and pos_eff.shape[0] != T_eff:
        pos_eff = pos_eff[:T_eff]

    # Batch-blocks innermost -> pos block index is constant across consecutive
    # steps (tile stays resident, no redundant HBM reads).  When there is only
    # one T block, lead with the batch axis so megacore sharding has work.
    if num_t == 1 and num_b > 1:
        grid = (num_b, num_t)
        x_map = lambda b, t: (b, t, 0)
        pos_map = lambda b, t: (t, 0)
    else:
        grid = (num_t, num_b)
        x_map = lambda t, b: (b, t, 0)
        pos_map = lambda t, b: (t, 0)

    cost = pl.CostEstimate(
        flops=B * T * D,
        transcendentals=0,
        bytes_accessed=2 * B * T * D * itemsize + T * D * itemsize,
    )

    out_eff = pl.pallas_call(
        _add_pos_kernel,
        out_shape=jax.ShapeDtypeStruct((B, T_eff, D_eff), dt),
        grid_spec=pltpu.PrefetchScalarGridSpec(
            num_scalar_prefetch=0,
            grid=grid,
            in_specs=[
                pl.BlockSpec((bB, tT, D_eff), x_map),
                # Kept double-buffered (and budgeted as such); its block index
                # only changes once per T-block so the extra buffer is cheap.
                pl.BlockSpec((tT, D_eff), pos_map),
            ],
            out_specs=pl.BlockSpec((bB, tT, D_eff), x_map),
        ),
        compiler_params=pltpu.CompilerParams(
            dimension_semantics=("parallel", "parallel"),
            vmem_limit_bytes=vmem_limit,
        ),
        cost_estimate=cost,
        # NOTE: input_output_aliases={0: 0} is a free win once callers donate x.
    )(x_eff, pos_eff)

    return out_eff.reshape(B, T, D)


def learned_positional_encoding(x, pos_embedding_table, *, use_pallas=None):
    """x: (B, T, D); pos_embedding_table: (max_len, D). Returns x + pos[:T]."""
    B, T, D = x.shape
    max_len = pos_embedding_table.shape[0]
    if T > max_len:
        raise ValueError(f"T={T} exceeds max_len={max_len}")

    if use_pallas is None:
        # Below ~2 MiB the pallas_call launch + per-step overhead loses to an
        # XLA add that can fuse into neighbouring ops.
        use_pallas = x.size * jnp.dtype(x.dtype).itemsize >= (1 << 21)
    if not use_pallas:
        return x + pos_embedding_table[:T].astype(x.dtype)[None, :, :]
    return _pallas_add_pos(x, pos_embedding_table)


if __name__ == "__main__":
    key = jax.random.PRNGKey(0)
    k1, k2, k3, k4 = jax.random.split(key, 4)

    # --- Case 1: small module-like shape (exercises the lane-densify fold) ----
    B, T, D, MAX_LEN = 2, 8, 32, 16
    x = jax.random.normal(k1, (B, T, D), dtype=jnp.float32)
    # nn.Embedding default init: N(0, 1) — deterministic synthetic weights.
    pos_table = jax.random.normal(k2, (MAX_LEN, D), dtype=jnp.float32)
    ref = x + pos_table[:T][None, :, :]

    out = jax.block_until_ready(
        learned_positional_encoding(x, pos_table, use_pallas=True))
    assert out.shape == (B, T, D)
    assert jnp.allclose(out, ref, atol=1e-6), "case 1: pallas kernel mismatch"

    out_auto = jax.block_until_ready(learned_positional_encoding(x, pos_table))
    assert jnp.allclose(out_auto, ref, atol=1e-6), "case 1: dispatch path mismatch"

    # --- Case 2: batched blocks + ragged T (cdiv grid, masked last tile) ------
    B2, T2, D2, MAX_LEN2 = 4, 100, 256, 128
    x2 = jax.random.normal(k3, (B2, T2, D2), dtype=jnp.float32)
    pos_table2 = jax.random.normal(k4, (MAX_LEN2, D2), dtype=jnp.float32)
    ref2 = x2 + pos_table2[:T2][None, :, :]

    out2 = jax.block_until_ready(
        learned_positional_encoding(x2, pos_table2, use_pallas=True))
    assert out2.shape == (B2, T2, D2)
    assert jnp.allclose(out2, ref2, atol=1e-6), "case 2: pallas kernel mismatch"

    print("KERNEL_OK")
</pallas_src>

<mosaic_0001>
module attributes {stable_mosaic.version = 11 : i64} {
  func.func @_add_pos_kernel(%arg0: i32, %arg1: i32, %arg2: memref<2x2x128xf32, #tpu.memory_space<vmem>>, %arg3: memref<2x128xf32, #tpu.memory_space<vmem>>, %arg4: memref<2x2x128xf32, #tpu.memory_space<vmem>>) attributes {dimension_semantics = [#tpu.dimension_semantics<parallel>, #tpu.dimension_semantics<parallel>], iteration_bounds = array<i64: 1, 1>, scalar_prefetch = 0 : i64, scratch_operands = 0 : i64, tpu.core_type = #tpu.core_type<tc>, window_params = [{transform_indices = @transform_0, window_bounds = array<i64: 2, 2, 128>}, {transform_indices = @transform_1, window_bounds = array<i64: 2, 128>}, {transform_indices = @transform_2, window_bounds = array<i64: 2, 2, 128>}]} {
    %c0 = arith.constant 0 : index
    %c0_0 = arith.constant 0 : index
    %c0_1 = arith.constant 0 : index
    %0 = vector.load %arg2[%c0, %c0_0, %c0_1] : memref<2x2x128xf32, #tpu.memory_space<vmem>>, vector<2x2x128xf32>
    %c0_2 = arith.constant 0 : index
    %c0_3 = arith.constant 0 : index
    %1 = vector.load %arg3[%c0_2, %c0_3] : memref<2x128xf32, #tpu.memory_space<vmem>>, vector<2x128xf32>
    %2 = vector.shape_cast %1 : vector<2x128xf32> to vector<1x2x128xf32>
    %3 = vector.broadcast %2 : vector<1x2x128xf32> to vector<2x2x128xf32>
    %4 = arith.addf %0, %3 : vector<2x2x128xf32>
    %c0_4 = arith.constant 0 : index
    %c0_5 = arith.constant 0 : index
    %c0_6 = arith.constant 0 : index
    %5 = vector.load %arg4[%c0_4, %c0_5, %c0_6] : memref<2x2x128xf32, #tpu.memory_space<vmem>>, vector<2x2x128xf32>
    tpu.vector_store %arg4[%c0_4, %c0_5, %c0_6], %4 {strides = array<i32>} : memref<2x2x128xf32, #tpu.memory_space<vmem>>, vector<2x2x128xf32>,
    return
  }
  func.func @transform_0(%arg0: i32, %arg1: i32) -> (i32, i32, i32) {
    %c0_i32 = arith.constant 0 : i32
    %c0_i32_0 = arith.constant 0 : i32
    return %arg1, %arg0, %c0_i32 : i32, i32, i32
  }
  func.func @transform_1(%arg0: i32, %arg1: i32) -> (i32, i32) {
    %c0_i32 = arith.constant 0 : i32
    %c0_i32_0 = arith.constant 0 : i32
    return %arg0, %c0_i32 : i32, i32
  }
  func.func @transform_2(%arg0: i32, %arg1: i32) -> (i32, i32, i32) {
    %c0_i32 = arith.constant 0 : i32
    %c0_i32_0 = arith.constant 0 : i32
    return %arg1, %arg0, %c0_i32 : i32, i32, i32
  }
}

</mosaic_0001>

<llo_original>
// kernel: tpu_custom_call.1
$region0: #{tpu_custom_call.1}
  #allocation0 [shape = 'u32[]', space=smem, size = 0x4, offset = 0x4, fixed_abs, tag = 'smem constant byte address 0x4 - core index']
  #allocation1 [shape = 'u32[144,128]{1,0:T(1,128)}', space=vmem, size = 0x12000, scoped, tag = 'internal scratch']
  %s0 = inlined_call_operand.hbm [shape: f32[2,2,128], index: 0, kind: input, shape index: {}]
  %s1 = inlined_call_operand.vmem [shape: f32[2,128], index: 1, kind: input, shape index: {}]
  %s2 = inlined_call_operand.hbm [shape: f32[2,2,128], index: 2, kind: output, shape index: {}]
  %s3 = sld [smem:[#allocation0]]
  $region22: #{tpu_custom_call.1} parent=0
    _
  %s5 = ssub.s32 1, %s3
  %s6 = scalar_select 0, %s5, %s3
  $region1: #{tpu_custom_call.1} parent=0
    #allocation2 [shape = 'u8[2048]{0}', space=vmem, size = 0x800, scoped, tag = 'input window, operand 0, single buffered']
    #allocation3 [shape = 's32[1]{0}', space=sflag, size = 0x4, scoped, tag = 'scoped memory for tpu_custom_call.1']
    #allocation4 [shape = 's32[1]{0}', space=sflag, size = 0x4, scoped, tag = 'scoped memory for tpu_custom_call.1']
    #allocation5 [shape = 'u8[2048]{0}', space=vmem, size = 0x800, scoped, tag = 'output window, operand 0, single buffered']
    %7 = vsyncpa [#allocation3], 0
    %8 = vsyncpa [#allocation4], 0
    // Predicated region
    $region2: #{tpu_custom_call.1} parent=1 // pred_check
      _
    $region3: #{tpu_custom_call.1} parent=1 // pred_check_branch
      %10 = sbr.rel (0) target = $region5
    $region4: #{tpu_custom_call.1} parent=1 // pred_region
      %s12 = ssub.s32 64, 64
      %13 = vsyncadd [#allocation3], %s12
      %s14 = sshll.u32 [#allocation2], 4
      %s15 = int_to_ptr.vmem [resolvable:$true] %s14
      %20 = dma.hbm_to_vmem [thread:$0]  %s0, 64, %s15, [#allocation3], 32, 32, 2
    $region5: #{tpu_custom_call.1} parent=1 // pred_fallthru
      _
    // Predicated region
    $region6: #{tpu_custom_call.1} parent=1 // pred_check
      _
    $region7: #{tpu_custom_call.1} parent=1 // pred_check_branch
      %22 = sbr.rel (0) target = $region9
    $region8: #{tpu_custom_call.1} parent=1 // pred_region
      _
    $region9: #{tpu_custom_call.1} parent=1 // pred_fallthru
      _
    // Predicated region
    $region10: #{tpu_custom_call.1} parent=1 // pred_check
      _
    $region11: #{tpu_custom_call.1} parent=1 // pred_check_branch
      %24 = sbr.rel (0) target = $region13
    $region12: #{tpu_custom_call.1} parent=1 // pred_region
      %25 = dma.done [#allocation3], 64
    $region13: #{tpu_custom_call.1} parent=1 // pred_fallthru
      _
    %v26 = vld [vmem:[#allocation2] sm:$0x3]
    %v27 = vld [vmem:[#allocation2 + $0x2] sm:$0x3]
    %v28 = vld [vmem:[%s1] sm:$0x3]
    %v29 = vadd.f32 %v26, %v28
    %v30 = vadd.f32 %v27, %v28
    %31 = vst [vmem:[#allocation5] sm:$0x3] %v29
    %32 = vst [vmem:[#allocation5 + $0x2] sm:$0x3] %v30
    // Predicated region
    $region14: #{tpu_custom_call.1} parent=1 // pred_check
      _
    $region15: #{tpu_custom_call.1} parent=1 // pred_check_branch
      %34 = sbr.rel (0) target = $region17
    $region16: #{tpu_custom_call.1} parent=1 // pred_region
      %s36 = ssub.s32 64, 64
      %37 = vsyncadd [#allocation4], %s36
      %s38 = sshll.u32 [#allocation5], 4
      %s39 = int_to_ptr.vmem [resolvable:$true] %s38
      %44 = dma.vmem_to_hbm [thread:$0]  %s39, 64, %s2, [#allocation4], 32, 32, 2
    $region17: #{tpu_custom_call.1} parent=1 // pred_fallthru
      _
    // Predicated region
    $region18: #{tpu_custom_call.1} parent=1 // pred_check
      _
    $region19: #{tpu_custom_call.1} parent=1 // pred_check_branch
      %46 = sbr.rel (0) target = $region21
    $region20: #{tpu_custom_call.1} parent=1 // pred_region
      %47 = dma.done [#allocation4], 64
    $region21: #{tpu_custom_call.1} parent=1 // pred_fallthru
      _
    %48 = vsyncpa [#allocation3], 1
    %49 = vsyncpa [#allocation4], 1

</llo_original>
